<compile_context>
chip_gen: v6e
topology: v6e:2x2x1
jax: 0.10.0
libtpu: 0.0.40
codegen_flags: <defaults>
</compile_context>

<pallas_src>
import functools
import math

import jax
import jax.numpy as jnp
from jax.experimental import pallas as pl
from jax.experimental.pallas import tpu as pltpu


def _pe_add_kernel(x_ref, pe_ref, o_ref, pe_lanes_ref, *, batch: int, d_model: int):
    # x_ref       : (tile_s, B*D) lane-dense tile of the flattened input
    # pe_ref      : (tile_s, D)   un-broadcast tile of the positional-encoding table
    # o_ref       : (tile_s, B*D) output tile
    # pe_lanes_ref: (tile_s, B*D) VMEM scratch holding pe replicated across the B lane-copies
    pe = pe_ref[...]                                           # (tile_s, D)
    # Replicate pe along lanes with B static slice-stores (VMEM-internal, tiny cost);
    # the x load and the output store below stay fully lane-dense.
    for b in range(batch):                                     # static, small B
        pe_lanes_ref[:, pl.ds(b * d_model, d_model)] = pe
    o_ref[...] = (x_ref[...] + pe_lanes_ref[...]).astype(o_ref.dtype)


def make_positional_encoding_table(d_model: int, max_len: int) -> jnp.ndarray:
    """Builds the (maxLen, 1, dModel) pe buffer exactly like the PyTorch __init__ (plain JAX glue)."""
    assert d_model % 2 == 0, "d_model must be even (same limitation as the PyTorch module)"
    position = jnp.arange(0, max_len, dtype=jnp.float32)[:, None]              # (maxLen, 1)
    denominator = jnp.exp(
        jnp.arange(0, d_model, 2, dtype=jnp.float32) * (math.log(10000.0) / d_model)
    )                                                                           # (dModel/2,)
    angles = position / denominator                                             # (maxLen, dModel/2)
    pe = jnp.zeros((max_len, d_model), dtype=jnp.float32)
    pe = pe.at[:, 0::2].set(jnp.sin(angles))
    pe = pe.at[:, 1::2].set(jnp.cos(angles))
    # unsqueeze(0).transpose(0, 1) -> (maxLen, 1, dModel)
    return pe[:, None, :]


def _choose_tile_s(seq: int, row_bytes: int,
                   target_block_bytes: int = 2 * 1024 * 1024,
                   min_grid_steps: int = 8) -> int:
    """Pick a seq tile that divides S, is a multiple of 8 (or == S), keeps one x block at
    ~<= target_block_bytes, and (when S allows) yields >= min_grid_steps grid steps."""
    divisors = [d for d in range(1, seq + 1) if seq % d == 0]
    candidates = [d for d in divisors if d % 8 == 0 or d == seq]
    cap = min(max(1, target_block_bytes // max(1, row_bytes)),
              max(1, seq // min_grid_steps))
    fitting = [d for d in candidates if d <= cap]
    return max(fitting) if fitting else min(candidates)


def positional_encoding_forward(x: jnp.ndarray, pe: jnp.ndarray, *,
                                tile_s: int | None = None) -> jnp.ndarray:
    """x: (seq, batch, d_model); pe: (maxLen, 1, d_model). Returns x + pe[:seq]."""
    S, B, D = x.shape
    assert pe.shape[0] >= S and pe.shape[2] == D

    # Match pe dtype/bytes to the activations (halves pe HBM traffic for bf16, avoids mixed-dtype VPU work).
    pe2d = pe[:S, 0, :].astype(x.dtype)                 # (S, D)
    x2d = x.reshape(S, B * D)                           # lane-dense slab (last dim on lanes)

    itemsize = jnp.dtype(x.dtype).itemsize
    if tile_s is None:
        tile_s = _choose_tile_s(S, B * D * itemsize)
    assert S % tile_s == 0, "seq tile must divide the sequence length"
    # TODO(synk): ragged S (no multiple-of-8 divisor) falls back to tile_s == S; pad S or use a
    #             masked tail if very long prime-length sequences must be tiled.
    grid = (S // tile_s,)

    kernel = functools.partial(_pe_add_kernel, batch=B, d_model=D)

    out2d = pl.pallas_call(
        kernel,
        out_shape=jax.ShapeDtypeStruct((S, B * D), x.dtype),
        grid_spec=pltpu.PrefetchScalarGridSpec(
            num_scalar_prefetch=0,
            grid=grid,
            in_specs=[
                pl.BlockSpec((tile_s, B * D), lambda i: (i, 0)),   # x slab (lane-dense)
                pl.BlockSpec((tile_s, D), lambda i: (i, 0)),       # un-broadcast pe
            ],
            out_specs=pl.BlockSpec((tile_s, B * D), lambda i: (i, 0)),
            scratch_shapes=[pltpu.VMEM((tile_s, B * D), x.dtype)],  # pe broadcast buffer
        ),
        compiler_params=pltpu.CompilerParams(
            dimension_semantics=("parallel",),          # seq axis shards across TCs on v7x
            vmem_limit_bytes=32 * 1024 * 1024,          # headroom over v5e's 16 MiB scoped default
        ),
        input_output_aliases={0: 0},                    # out may reuse x's buffer when donated
        cost_estimate=pl.CostEstimate(
            flops=S * B * D,
            transcendentals=0,
            bytes_accessed=int((2 * S * B * D + S * D) * itemsize),
        ),
    )(x2d, pe2d)

    return out2d.reshape(S, B, D)


if __name__ == "__main__":
    # Small shapes consistent with the module's forward: (seq, batch, d_model).
    # seq=64 with the default tiling exercises a multi-step grid (tile_s=8 -> grid=(8,)).
    d_model = 32
    max_len = 128
    seq = 64
    batch = 4

    key = jax.random.PRNGKey(0)
    x = jax.random.normal(key, (seq, batch, d_model), dtype=jnp.float32)
    pe = make_positional_encoding_table(d_model, max_len)

    # Reference computed BEFORE the kernel call (kernel output may alias x's buffer when donated).
    ref = jax.block_until_ready(x + pe[:seq])

    out = jax.jit(positional_encoding_forward)(x, pe)
    out = jax.block_until_ready(out)

    assert out.shape == (seq, batch, d_model)
    assert jnp.allclose(out, ref, atol=1e-6), "mismatch vs reference"

    print("KERNEL_OK")
</pallas_src>

<mosaic_0001>
module attributes {stable_mosaic.version = 11 : i64} {
  func.func @_pe_add_kernel(%arg0: i32, %arg1: memref<8x128xf32, #tpu.memory_space<vmem>>, %arg2: memref<8x32xf32, #tpu.memory_space<vmem>>, %arg3: memref<8x128xf32, #tpu.memory_space<vmem>>, %arg4: memref<8x128xf32, #tpu.memory_space<vmem>>) attributes {dimension_semantics = [#tpu.dimension_semantics<parallel>], iteration_bounds = array<i64: 8>, scalar_prefetch = 0 : i64, scratch_operands = 1 : i64, tpu.core_type = #tpu.core_type<tc>, window_params = [{transform_indices = @transform_0, window_bounds = array<i64: 8, 128>}, {transform_indices = @transform_1, window_bounds = array<i64: 8, 32>}, {transform_indices = @transform_2, window_bounds = array<i64: 8, 128>}]} {
    %c0 = arith.constant 0 : index
    %c0_0 = arith.constant 0 : index
    %0 = vector.load %arg2[%c0, %c0_0] : memref<8x32xf32, #tpu.memory_space<vmem>>, vector<8x32xf32>
    %c0_1 = arith.constant 0 : index
    %c0_2 = arith.constant 0 : index
    %1 = vector.load %arg4[%c0_1, %c0_2] : memref<8x128xf32, #tpu.memory_space<vmem>>, vector<8x32xf32>
    tpu.vector_store %arg4[%c0_1, %c0_2], %0 {strides = array<i32>} : memref<8x128xf32, #tpu.memory_space<vmem>>, vector<8x32xf32>,
    %c0_3 = arith.constant 0 : index
    %c32 = arith.constant 32 : index
    %2 = vector.load %arg4[%c0_3, %c32] : memref<8x128xf32, #tpu.memory_space<vmem>>, vector<8x32xf32>
    tpu.vector_store %arg4[%c0_3, %c32], %0 {strides = array<i32>} : memref<8x128xf32, #tpu.memory_space<vmem>>, vector<8x32xf32>,
    %c0_4 = arith.constant 0 : index
    %c64 = arith.constant 64 : index
    %3 = vector.load %arg4[%c0_4, %c64] : memref<8x128xf32, #tpu.memory_space<vmem>>, vector<8x32xf32>
    tpu.vector_store %arg4[%c0_4, %c64], %0 {strides = array<i32>} : memref<8x128xf32, #tpu.memory_space<vmem>>, vector<8x32xf32>,
    %c0_5 = arith.constant 0 : index
    %c96 = arith.constant 96 : index
    %4 = vector.load %arg4[%c0_5, %c96] : memref<8x128xf32, #tpu.memory_space<vmem>>, vector<8x32xf32>
    tpu.vector_store %arg4[%c0_5, %c96], %0 {strides = array<i32>} : memref<8x128xf32, #tpu.memory_space<vmem>>, vector<8x32xf32>,
    %c0_6 = arith.constant 0 : index
    %c0_7 = arith.constant 0 : index
    %5 = vector.load %arg1[%c0_6, %c0_7] : memref<8x128xf32, #tpu.memory_space<vmem>>, vector<8x128xf32>
    %c0_8 = arith.constant 0 : index
    %c0_9 = arith.constant 0 : index
    %6 = vector.load %arg4[%c0_8, %c0_9] : memref<8x128xf32, #tpu.memory_space<vmem>>, vector<8x128xf32>
    %7 = arith.addf %5, %6 : vector<8x128xf32>
    %c0_10 = arith.constant 0 : index
    %c0_11 = arith.constant 0 : index
    %8 = vector.load %arg3[%c0_10, %c0_11] : memref<8x128xf32, #tpu.memory_space<vmem>>, vector<8x128xf32>
    tpu.vector_store %arg3[%c0_10, %c0_11], %7 {strides = array<i32>} : memref<8x128xf32, #tpu.memory_space<vmem>>, vector<8x128xf32>,
    return
  }
  func.func @transform_0(%arg0: i32) -> (i32, i32) {
    %c0_i32 = arith.constant 0 : i32
    %c0_i32_0 = arith.constant 0 : i32
    return %arg0, %c0_i32 : i32, i32
  }
  func.func @transform_1(%arg0: i32) -> (i32, i32) {
    %c0_i32 = arith.constant 0 : i32
    %c0_i32_0 = arith.constant 0 : i32
    return %arg0, %c0_i32 : i32, i32
  }
  func.func @transform_2(%arg0: i32) -> (i32, i32) {
    %c0_i32 = arith.constant 0 : i32
    %c0_i32_0 = arith.constant 0 : i32
    return %arg0, %c0_i32 : i32, i32
  }
}

</mosaic_0001>

<llo_original>
// kernel: positional_encoding_forward.1
$region0: #{positional_encoding_forward.1}
  #allocation0 [shape = 'u32[]', space=smem, size = 0x4, offset = 0x4, fixed_abs, tag = 'smem constant byte address 0x4 - core index']
  #allocation1 [shape = 'u32[144,128]{1,0:T(1,128)}', space=vmem, size = 0x12000, scoped, tag = 'internal scratch']
  #allocation2 [shape = 'f32[8,128]{1,0:T(8,128)}', space=vmem, size = 0x1000, scoped, tag = 'scratch operand']
  %s0 = inlined_call_operand.vmem [shape: f32[64,128], index: 0, kind: input, shape index: {}, may-alias: {0,2}]
  %s1 = inlined_call_operand.vmem [shape: f32[64,32], index: 1, kind: input, shape index: {}]
  %s2 = inlined_call_operand.vmem [shape: f32[64,128], index: 2, kind: output, shape index: {}, may-alias: {0,2}]
  %s3 = sld [smem:[#allocation0]]
  $region41: #{positional_encoding_forward.1} parent=0
    _
  %s5 = ssub.s32 1, %s3
  %s6 = scalar_select 0, %s5, %s3
  loop: start=0, step=1, limit=10
  $region2: #{positional_encoding_forward.1} parent=0 // loop_pre_header
    _
  $region3: #{positional_encoding_forward.1} parent=0 // loop_header
    %s8 = sphi 0, %s12
    %p9 = scmp.ge.s32.totalorder %s8, 10
    %s18 = sphi 0, %s20
    %s21 = sphi 0, %s18
    %s22 = sphi 0, %s21
    %s38 = sphi 0, %s22
    %s44 = sphi 0, %s46
    %s47 = sphi 0, %s44
    %s48 = sphi 0, %s47
    %s64 = sphi 0, %s48
    %s70 = sphi 0, %s72
    %s73 = sphi 0, %s70
    %s74 = sphi 0, %s73
    %s90 = sphi 0, %s74
  $region4: #{positional_encoding_forward.1} parent=0 // loop_header_branch
    %11 = sbr.rel (%p9) target = $region8
  $region5: #{positional_encoding_forward.1} parent=0 // loop_body
    %s13 = ssub.s32 %s8, 1
    %s14 = ssub.s32 %s8, 2
    %s15 = sadd.s32 %s8, 1
    %s16 = ssub.s32 %s8, %s15
    %p17 = scmp.eq.s32.totalorder %s16, 0
    %s19 = sadd.s32 %s18, 1
    %s20 = scalar_select %p17, %s18, %s19
    %p23 = pneg %p17
    %p24 = scmp.eq.s32.totalorder %s8, 7
    %p25 = por %p23, %p24
    %p26 = scmp.ne.s32.totalorder %s18, %s21
    %p27 = scmp.eq.s32.totalorder %s8, 0
    %p28 = por %p26, %p27
    %p29 = scmp.ne.s32.totalorder %s18, %s21
    %p30 = scmp.eq.s32.totalorder %s13, 7
    %p31 = por %p29, %p30
    %p32 = scmp.ne.s32.totalorder %s21, %s22
    %p33 = scmp.eq.s32.totalorder %s13, 0
    %p34 = por %p32, %p33
    %p35 = scmp.ne.s32.totalorder %s21, %s22
    %p36 = scmp.eq.s32.totalorder %s14, 7
    %p37 = por %p35, %p36
    %p39 = scmp.ne.s32.totalorder %s22, %s38
    %p40 = scmp.eq.s32.totalorder %s14, 0
    %p41 = por %p39, %p40
    %s42 = ssub.s32 %s8, %s15
    %p43 = scmp.eq.s32.totalorder %s42, 0
    %s45 = sadd.s32 %s44, 1
    %s46 = scalar_select %p43, %s44, %s45
    %p49 = pneg %p43
    %p50 = scmp.eq.s32.totalorder %s8, 7
    %p51 = por %p49, %p50
    %p52 = scmp.ne.s32.totalorder %s44, %s47
    %p53 = scmp.eq.s32.totalorder %s8, 0
    %p54 = por %p52, %p53
    %p55 = scmp.ne.s32.totalorder %s44, %s47
    %p56 = scmp.eq.s32.totalorder %s13, 7
    %p57 = por %p55, %p56
    %p58 = scmp.ne.s32.totalorder %s47, %s48
    %p59 = scmp.eq.s32.totalorder %s13, 0
    %p60 = por %p58, %p59
    %p61 = scmp.ne.s32.totalorder %s47, %s48
    %p62 = scmp.eq.s32.totalorder %s14, 7
    %p63 = por %p61, %p62
    %p65 = scmp.ne.s32.totalorder %s48, %s64
    %p66 = scmp.eq.s32.totalorder %s14, 0
    %p67 = por %p65, %p66
    %s68 = ssub.s32 %s8, %s15
    %p69 = scmp.eq.s32.totalorder %s68, 0
    %s71 = sadd.s32 %s70, 1
    %s72 = scalar_select %p69, %s70, %s71
    %p75 = pneg %p69
    %p76 = scmp.eq.s32.totalorder %s8, 7
    %p77 = por %p75, %p76
    %p78 = scmp.ne.s32.totalorder %s70, %s73
    %p79 = scmp.eq.s32.totalorder %s8, 0
    %p80 = por %p78, %p79
    %p81 = scmp.ne.s32.totalorder %s70, %s73
    %p82 = scmp.eq.s32.totalorder %s13, 7
    %p83 = por %p81, %p82
    %p84 = scmp.ne.s32.totalorder %s73, %s74
    %p85 = scmp.eq.s32.totalorder %s13, 0
    %p86 = por %p84, %p85
    %p87 = scmp.ne.s32.totalorder %s73, %s74
    %p88 = scmp.eq.s32.totalorder %s14, 7
    %p89 = por %p87, %p88
    %p91 = scmp.ne.s32.totalorder %s74, %s90
    %p92 = scmp.eq.s32.totalorder %s14, 0
    %p93 = por %p91, %p92
    %p94 = scmp.le.s32.totalorder 1, %s8
    %p95 = scmp.lt.s32.totalorder %s8, 9
    %p96 = pnand %p94, %p95
    %p97 = pneg %p96
    // Predicated region
    $region9: #{positional_encoding_forward.1} parent=5 // pred_check
      _
    $region10: #{positional_encoding_forward.1} parent=5 // pred_check_branch
      %99 = sbr.rel (%p96) target = $region12
    $region11: #{positional_encoding_forward.1} parent=5 // pred_region
      %s100 = ssub.s32 %s8, 1
    $region12: #{positional_encoding_forward.1} parent=5 // pred_fallthru
      _
    %p101 = scmp.lt.s32.totalorder %s8, 8
    // Predicated region
    $region13: #{positional_encoding_forward.1} parent=5 // pred_check
      %p102 = pneg %p101
    $region14: #{positional_encoding_forward.1} parent=5 // pred_check_branch
      %104 = sbr.rel (%p102) target = $region16
    $region15: #{positional_encoding_forward.1} parent=5 // pred_region
      // Predicated region
      $region17: #{positional_encoding_forward.1} parent=15 // pred_check
        %p105 = pneg %p28
      $region18: #{positional_encoding_forward.1} parent=15 // pred_check_branch
        %107 = sbr.rel (%p105) target = $region20
      $region19: #{positional_encoding_forward.1} parent=15 // pred_region
        %p108 = scmp.lt.s32.totalorder %s8, 7
        %s109 = scalar_select %p108, %s8, 7
        %s110 = smul.addr %s109, 8
        %s111 = scalar_lea.vmem %s0, %s110
      $region20: #{positional_encoding_forward.1} parent=15 // pred_fallthru
        _
      // Predicated region
      $region21: #{positional_encoding_forward.1} parent=15 // pred_check
        %p112 = pneg %p54
      $region22: #{positional_encoding_forward.1} parent=15 // pred_check_branch
        %114 = sbr.rel (%p112) target = $region24
      $region23: #{positional_encoding_forward.1} parent=15 // pred_region
        %p115 = scmp.lt.s32.totalorder %s8, 7
        %s116 = scalar_select %p115, %s8, 7
        %s117 = smul.addr %s116, 8
        %s118 = scalar_lea.vmem %s1, %s117
      $region24: #{positional_encoding_forward.1} parent=15 // pred_fallthru
        _
    $region16: #{positional_encoding_forward.1} parent=5 // pred_fallthru
      _
    %p119 = scmp.le.s32.totalorder 1, %s8
    %p120 = scmp.lt.s32.totalorder %s8, 9
    %p121 = pnand %p119, %p120
    %p122 = pneg %p121
    // Predicated region
    $region25: #{positional_encoding_forward.1} parent=5 // pred_check
      _
    $region26: #{positional_encoding_forward.1} parent=5 // pred_check_branch
      %124 = sbr.rel (%p121) target = $region28
    $region27: #{positional_encoding_forward.1} parent=5 // pred_region
      %s125 = ssub.s32 %s8, 1
      %p126 = scmp.lt.s32.totalorder %s13, 7
      %s127 = scalar_select %p126, %s13, 7
      %s128 = smul.addr %s127, 8
      %s129 = scalar_lea.vmem %s0, %s128
      %p130 = pneg %p34
      %p131 = pneg %p31
      %p132 = scmp.lt.s32.totalorder %s13, 7
      %s133 = scalar_select %p132, %s13, 7
      %s134 = smul.addr %s133, 8
      %s135 = scalar_lea.vmem %s1, %s134
      %p136 = pneg %p60
      %p137 = pneg %p57
      %p138 = pneg %p86
      %p139 = pneg %p83
      %p140 = scmp.lt.s32.totalorder %s13, 7
      %s141 = scalar_select %p140, %s13, 7
      %s142 = smul.addr %s141, 8
      %s143 = scalar_lea.vmem %s2, %s142
      %p144 = scmp.lt.s32.totalorder %s13, 7
      %s145 = scalar_select %p144, %s13, 7
      %s146 = smul.addr %s145, 8
      %s147 = scalar_lea.vmem %s0, %s146
      %p148 = scmp.lt.s32.totalorder %s13, 7
      %s149 = scalar_select %p148, %s13, 7
      %s150 = smul.addr %s149, 8
      %s151 = scalar_lea.vmem %s1, %s150
      %p152 = scmp.lt.s32.totalorder %s13, 7
      %s153 = scalar_select %p152, %s13, 7
      %s154 = smul.addr %s153, 8
      %s155 = scalar_lea.vmem %s2, %s154
      %v156 = vld [vmem:[%s151] sm:$0xff]
      %vm157 = vcmask 261120
      %158 = vst.msk [vmem:[#allocation2] sm:$0xff] %vm157, %v156
      %160 = vrot.lane.b32.xlu0 %v156, 32
      %v161 = vpop.permute.xlu0 %160
      %vm163 = vcmask 523520
      %164 = vst.msk [vmem:[#allocation2] sm:$0xff] %vm163, %v161
      %165 = vrot.lane.b32.xlu0 %v156, 64
      %v166 = vpop.permute.xlu0 %165
      %vm168 = vcmask 785920
      %169 = vst.msk [vmem:[#allocation2] sm:$0xff] %vm168, %v166
      %170 = vrot.lane.b32.xlu0 %v156, 96
      %v171 = vpop.permute.xlu0 %170
      %vm173 = vcmask 1048320
      %174 = vst.msk [vmem:[#allocation2] sm:$0xff] %vm173, %v171
      %v175 = vld [vmem:[%s147] sm:$0xff]
      %v176 = vld [vmem:[#allocation2] sm:$0xff]
      %v177 = vadd.f32 %v175, %v176
      %178 = vst [vmem:[%s155] sm:$0xff] %v177
      %p179 = scmp.lt.s32.totalorder %s13, 7
      %s180 = scalar_select %p179, %s13, 7
      %s181 = smul.addr %s180, 8
      %s182 = scalar_lea.vmem %s2, %s181
      // Predicated region
      $region29: #{positional_encoding_forward.1} parent=27 // pred_check
        %p183 = pneg %p83
      $region30: #{positional_encoding_forward.1} parent=27 // pred_check_branch
        %185 = sbr.rel (%p183) target = $region32
      $region31: #{positional_encoding_forward.1} parent=27 // pred_region
        _
      $region32: #{positional_encoding_forward.1} parent=27 // pred_fallthru
        _
    $region28: #{positional_encoding_forward.1} parent=5 // pred_fallthru
      _
    %p186 = scmp.le.s32.totalorder 2, %s8
    // Predicated region
    $region33: #{positional_encoding_forward.1} parent=5 // pred_check
      %p187 = pneg %p186
    $region34: #{positional_encoding_forward.1} parent=5 // pred_check_branch
      %189 = sbr.rel (%p187) target = $region36
    $region35: #{positional_encoding_forward.1} parent=5 // pred_region
      %s190 = ssub.s32 %s8, 2
      // Predicated region
      $region37: #{positional_encoding_forward.1} parent=35 // pred_check
        %p191 = pneg %p89
      $region38: #{positional_encoding_forward.1} parent=35 // pred_check_branch
        %193 = sbr.rel (%p191) target = $region40
      $region39: #{positional_encoding_forward.1} parent=35 // pred_region
        %p194 = scmp.lt.s32.totalorder %s14, 7
        %s195 = scalar_select %p194, %s14, 7
        %s196 = smul.addr %s195, 8
        %s197 = scalar_lea.vmem %s2, %s196
      $region40: #{positional_encoding_forward.1} parent=35 // pred_fallthru
        _
    $region36: #{positional_encoding_forward.1} parent=5 // pred_fallthru
      _
  $region6: #{positional_encoding_forward.1} parent=0 // loop_footer
    %s12 = sadd.s32 1, %s8
  $region7: #{positional_encoding_forward.1} parent=0 // loop_footer_branch
    %7 = sbr.rel target = $region3
  $region8: #{positional_encoding_forward.1} parent=0 // loop_exit
    _

</llo_original>
